<compile_context>
chip_gen: v6e
topology: v6e:2x2x1
jax: 0.10.0
libtpu: 0.0.40
codegen_flags: <defaults>
</compile_context>

<pallas_src>
import numpy as np
import jax
import jax.numpy as jnp
from jax import lax
from jax.experimental import pallas as pl
from jax.experimental.pallas import tpu as pltpu


def _softplus(x):
    # Matches torch.nn.Softplus (beta=1, threshold=20): identity above threshold.
    e = jnp.exp(jnp.minimum(x, 20.0))
    return jnp.where(x > 20.0, x, jnp.log(1.0 + e))


def _lgamma_data_plus_one(data):
    # lgamma(data + 1) for Poisson counts via a 2-term Stirling series at
    # z = data + 1:  0.5*log(2*pi) + (z-0.5)*log(z) - z + 1/(12z) - 1/(360z^3).
    # Exact 0 for counts < 1 (lgamma(1) = 0); for integer counts >= 1 (z >= 2)
    # the series error is <= ~2e-5 -- inside the 1e-4 tolerance and ~4x fewer
    # VALU ops than the previous Lanczos rational, with the only reciprocal on
    # the EUP.  (Assumes data are non-negative integer counts, as Poisson does.)
    z = data + 1.0
    inv_z = pl.reciprocal(z, approx=True)        # correction terms are <= 0.042,
    inv_z2 = inv_z * inv_z                       # so 2^-12 rel. error is harmless
    series = (0.9189385332046727                 # 0.5*log(2*pi)
              + (z - 0.5) * jnp.log(z) - z
              + inv_z * (1.0 / 12.0 - (1.0 / 360.0) * inv_z2))
    return jnp.where(data < 1.0, 0.0, series)


def _poisson_nll_kernel(w_ref, d_ref,
                        w1_ref, b1_ref, w2_ref, b2_ref, w3_ref, b3_ref,
                        out_ref):
    # x is (row_tile, 2*nf) in natural layout; every matmul output is
    # (feat, rows) so rows sit on lanes for the elementwise epilogue.
    x = w_ref[...]
    last_vs_last = (((1,), (1,)), ((), ()))          # A @ B.T contraction

    h1 = jnp.tanh(lax.dot_general(w1_ref[...], x, last_vs_last,
                                  preferred_element_type=jnp.float32)
                  + b1_ref[...])                     # (n, R)
    h2 = jnp.tanh(jnp.dot(w2_ref[...], h1, preferred_element_type=jnp.float32)
                  + b2_ref[...])                     # (64, R)
    z = (jnp.dot(w3_ref[...], h2, preferred_element_type=jnp.float32)
         + b3_ref[...])                              # (x_dim, R)

    # Transpose the (R, x_dim) data tile to (x_dim, R) with an identity matmul:
    # exact in f32, rides the near-idle MXU instead of the VALU/XLU.
    d_nat = d_ref[...]
    x_dim = d_nat.shape[1]
    r_idx = lax.broadcasted_iota(jnp.int32, (x_dim, x_dim), 0)
    c_idx = lax.broadcasted_iota(jnp.int32, (x_dim, x_dim), 1)
    eye = jnp.where(r_idx == c_idx, 1.0, 0.0).astype(jnp.float32)
    data = lax.dot_general(eye, d_nat, last_vs_last,
                           preferred_element_type=jnp.float32)   # (x_dim, R)

    # rate = 1/softplus(z);  -data*log(rate) == +data*log(softplus(z)).
    sp = _softplus(z)
    log_sp = jnp.log(sp)
    # EUP approx reciprocal + one Newton step (~f32 exact); keeps the divide off
    # the saturating VALU slot on v6e/v7x.  (v5e: if a bundle dump shows the EUP
    # as the binding slot there, switch back to approx=False.)
    r = pl.reciprocal(sp, approx=True)
    rate = r * (2.0 - sp * r)

    loss = rate + data * log_sp + _lgamma_data_plus_one(data)

    # Mean over x_dim (sublane axis) -> lane-dense (1, row_tile) output block;
    # the 1/x_dim scale is a single multiply (no per-element divide).
    out_ref[...] = jnp.sum(loss, axis=0, keepdims=True) * (1.0 / float(x_dim))


def _param_idxs(num_freqs):
    total = sum(num_freqs)
    idxs, cumul = [], 0
    for nf in num_freqs:
        idxs.append(np.concatenate([cumul + np.arange(nf),
                                    total + cumul + np.arange(nf)]))
        cumul += nf
    return idxs


def _round_up(x, m):
    return -(-x // m) * m


def _pick_row_tile(M, target):
    """Lane-dense (multiple-of-128) row tile.

    Large M: ~`target` rows per step so the ~0.35us/step grid overhead is
    amortized.  Small M: one tile.  Medium M (>= 2048 rows): at least two
    tiles so both v7x TensorCores get work while tiles stay >= ~1024 rows.
    """
    m128 = _round_up(M, 128)
    rt = min(_round_up(target, 128), m128)
    nt = -(-m128 // rt)
    if nt == 1 and m128 >= 2048:
        nt = 2
    rt = _round_up(-(-m128 // nt), 128)   # rebalance tiles to minimize padding
    return max(rt, 128)


def poisson_nll_forward(w, data, params, *, num_freqs=None, row_tile=2048):
    """w: [T, B, 2*nf] float32, data: [T, B, x_dim] float32 -> [T, B] float32."""
    w1, b1, w2, b2, w3, b3 = params
    if num_freqs is not None:
        # w_rate = w[..., param_idxs[0]]  (identity when num_freqs has one entry)
        w = w[..., np.asarray(_param_idxs(num_freqs)[0])]
    T, B, two_nf = w.shape
    x_dim = data.shape[-1]
    M = T * B

    rt = _pick_row_tile(M, row_tile)
    num_tiles = -(-M // rt)
    M_pad = num_tiles * rt

    # Natural (rows, feat) layout -- no wrapper-side transposes.
    w2d = w.reshape(M, two_nf)
    d2d = data.reshape(M, x_dim)
    if M_pad != M:
        # Zero pad rows: they produce finite losses and are sliced off below.
        w2d = jnp.pad(w2d, ((0, M_pad - M), (0, 0)))
        d2d = jnp.pad(d2d, ((0, M_pad - M), (0, 0)))

    # Biases as (feat, 1) columns so they broadcast along lanes in the kernel.
    b1c, b2c, b3c = b1[:, None], b2[:, None], b3[:, None]

    const = lambda a: pl.BlockSpec(a.shape, lambda i: (0, 0))
    out = pl.pallas_call(
        _poisson_nll_kernel,
        out_shape=jax.ShapeDtypeStruct((1, M_pad), jnp.float32),
        grid=(num_tiles,),
        in_specs=[
            pl.BlockSpec((rt, two_nf), lambda i: (i, 0)),
            pl.BlockSpec((rt, x_dim), lambda i: (i, 0)),
            const(w1), const(b1c), const(w2), const(b2c), const(w3), const(b3c),
        ],
        out_specs=pl.BlockSpec((1, rt), lambda i: (0, i)),
        compiler_params=pltpu.CompilerParams(
            dimension_semantics=("parallel",)),   # shards tiles across v7x's 2 TCs
    )(w2d, d2d, w1, b1c, w2, b2c, w3, b3c)

    return out[0, :M].reshape(T, B)


def _reference_forward(w, data, params):
    w1, b1, w2, b2, w3, b3 = params
    h1 = jnp.tanh(w @ w1.T + b1)
    h2 = jnp.tanh(h1 @ w2.T + b2)
    z = h2 @ w3.T + b3
    sp = jnp.where(z > 20.0, z, jnp.log1p(jnp.exp(jnp.minimum(z, 20.0))))
    rate = 1.0 / sp
    loss = rate - data * jnp.log(rate) + jax.scipy.special.gammaln(data + 1.0)
    return jnp.mean(loss, axis=-1)


def _init_linear(key, fan_in, fan_out):
    # Deterministic stand-in for torch.nn.Linear default init.
    kw, kb = jax.random.split(key)
    bound = 1.0 / jnp.sqrt(float(fan_in))
    w = jax.random.uniform(kw, (fan_out, fan_in), jnp.float32, -bound, bound)
    b = jax.random.uniform(kb, (fan_out,), jnp.float32, -bound, bound)
    return w, b


if __name__ == "__main__":
    # Module config: num_freqs = [4] -> decoder input dim = 2*4 = 8, n = 32, x_dim = 16.
    nf, n, x_dim = 4, 32, 16
    T, B = 8, 2

    key = jax.random.PRNGKey(0)
    k_w, k_d, k1, k2, k3 = jax.random.split(key, 5)

    w1, b1 = _init_linear(k1, 2 * nf, n)      # l1_rate
    w2, b2 = _init_linear(k2, n, 64)          # l2_rate
    w3, b3 = _init_linear(k3, 64, x_dim)      # l3_rate
    params = (w1, b1, w2, b2, w3, b3)

    w = jax.random.normal(k_w, (T, B, 2 * nf), jnp.float32)
    data = jax.random.randint(k_d, (T, B, x_dim), 0, 10).astype(jnp.float32)

    out = poisson_nll_forward(w, data, params, num_freqs=[nf])
    out = jax.block_until_ready(out)

    ref = _reference_forward(w, data, params)
    assert out.shape == (T, B)
    if not jnp.allclose(out, ref, rtol=1e-4, atol=1e-4):
        raise AssertionError("Pallas kernel output does not match reference")

    print("KERNEL_OK")
</pallas_src>

<mosaic_0001>
module attributes {stable_mosaic.version = 11 : i64} {
  func.func @_poisson_nll_kernel(%arg0: i32, %arg1: memref<128x8xf32, #tpu.memory_space<vmem>>, %arg2: memref<128x16xf32, #tpu.memory_space<vmem>>, %arg3: memref<32x8xf32, #tpu.memory_space<vmem>>, %arg4: memref<32x1xf32, #tpu.memory_space<vmem>>, %arg5: memref<64x32xf32, #tpu.memory_space<vmem>>, %arg6: memref<64x1xf32, #tpu.memory_space<vmem>>, %arg7: memref<16x64xf32, #tpu.memory_space<vmem>>, %arg8: memref<16x1xf32, #tpu.memory_space<vmem>>, %arg9: memref<1x128xf32, #tpu.memory_space<vmem>>) attributes {dimension_semantics = [#tpu.dimension_semantics<parallel>], iteration_bounds = array<i64: 1>, scalar_prefetch = 0 : i64, scratch_operands = 0 : i64, tpu.core_type = #tpu.core_type<tc>, window_params = [{transform_indices = @transform_0, window_bounds = array<i64: 128, 8>}, {transform_indices = @transform_1, window_bounds = array<i64: 128, 16>}, {pipeline_mode = #tpu.pipeline_mode<synchronous>, transform_indices = @transform_2, window_bounds = array<i64: 32, 8>}, {pipeline_mode = #tpu.pipeline_mode<synchronous>, transform_indices = @transform_3, window_bounds = array<i64: 32, 1>}, {pipeline_mode = #tpu.pipeline_mode<synchronous>, transform_indices = @transform_4, window_bounds = array<i64: 64, 32>}, {pipeline_mode = #tpu.pipeline_mode<synchronous>, transform_indices = @transform_5, window_bounds = array<i64: 64, 1>}, {pipeline_mode = #tpu.pipeline_mode<synchronous>, transform_indices = @transform_6, window_bounds = array<i64: 16, 64>}, {pipeline_mode = #tpu.pipeline_mode<synchronous>, transform_indices = @transform_7, window_bounds = array<i64: 16, 1>}, {transform_indices = @transform_8, window_bounds = array<i64: 1, 128>}]} {
    %c0 = arith.constant 0 : index
    %c0_0 = arith.constant 0 : index
    %0 = vector.load %arg1[%c0, %c0_0] : memref<128x8xf32, #tpu.memory_space<vmem>>, vector<128x8xf32>
    %c0_1 = arith.constant 0 : index
    %c0_2 = arith.constant 0 : index
    %1 = vector.load %arg3[%c0_1, %c0_2] : memref<32x8xf32, #tpu.memory_space<vmem>>, vector<32x8xf32>
    %cst = arith.constant dense<0.000000e+00> : vector<32x128xf32>
    %2 = tpu.matmul %1, %0, %cst {dimension_numbers = #tpu.dot_dimension_numbers<[1], [1], [0], [0], [0, 0, 1, 0], [], []>} : vector<32x8xf32>, vector<128x8xf32>, vector<32x128xf32> -> vector<32x128xf32>
    %c0_3 = arith.constant 0 : index
    %c0_4 = arith.constant 0 : index
    %3 = vector.load %arg4[%c0_3, %c0_4] : memref<32x1xf32, #tpu.memory_space<vmem>>, vector<32x1xf32>
    %4 = vector.broadcast %3 : vector<32x1xf32> to vector<32x128xf32>
    %5 = arith.addf %2, %4 : vector<32x128xf32>
    %6 = math.tanh %5 : vector<32x128xf32>
    %c0_5 = arith.constant 0 : index
    %c0_6 = arith.constant 0 : index
    %7 = vector.load %arg5[%c0_5, %c0_6] : memref<64x32xf32, #tpu.memory_space<vmem>>, vector<64x32xf32>
    %cst_7 = arith.constant dense<0.000000e+00> : vector<64x128xf32>
    %8 = tpu.matmul %7, %6, %cst_7 {dimension_numbers = #tpu.dot_dimension_numbers<[1], [0], [0], [1], [0, 0, 1, 1], [], []>} : vector<64x32xf32>, vector<32x128xf32>, vector<64x128xf32> -> vector<64x128xf32>
    %c0_8 = arith.constant 0 : index
    %c0_9 = arith.constant 0 : index
    %9 = vector.load %arg6[%c0_8, %c0_9] : memref<64x1xf32, #tpu.memory_space<vmem>>, vector<64x1xf32>
    %10 = vector.broadcast %9 : vector<64x1xf32> to vector<64x128xf32>
    %11 = arith.addf %8, %10 : vector<64x128xf32>
    %12 = math.tanh %11 : vector<64x128xf32>
    %c0_10 = arith.constant 0 : index
    %c0_11 = arith.constant 0 : index
    %13 = vector.load %arg7[%c0_10, %c0_11] : memref<16x64xf32, #tpu.memory_space<vmem>>, vector<16x64xf32>
    %cst_12 = arith.constant dense<0.000000e+00> : vector<16x128xf32>
    %14 = tpu.matmul %13, %12, %cst_12 {dimension_numbers = #tpu.dot_dimension_numbers<[1], [0], [0], [1], [0, 0, 1, 1], [], []>} : vector<16x64xf32>, vector<64x128xf32>, vector<16x128xf32> -> vector<16x128xf32>
    %c0_13 = arith.constant 0 : index
    %c0_14 = arith.constant 0 : index
    %15 = vector.load %arg8[%c0_13, %c0_14] : memref<16x1xf32, #tpu.memory_space<vmem>>, vector<16x1xf32>
    %16 = vector.broadcast %15 : vector<16x1xf32> to vector<16x128xf32>
    %17 = arith.addf %14, %16 : vector<16x128xf32>
    %c0_15 = arith.constant 0 : index
    %c0_16 = arith.constant 0 : index
    %18 = vector.load %arg2[%c0_15, %c0_16] : memref<128x16xf32, #tpu.memory_space<vmem>>, vector<128x16xf32>
    %19 = tpu.iota {dimensions = array<i32: 0>} : vector<16x16xi32>
    %20 = tpu.iota {dimensions = array<i32: 1>} : vector<16x16xi32>
    %21 = arith.cmpi eq, %19, %20 : vector<16x16xi32>
    %cst_17 = arith.constant 1.000000e+00 : f32
    %cst_18 = arith.constant 0.000000e+00 : f32
    %22 = vector.broadcast %cst_17 : f32 to vector<16x16xf32>
    %23 = vector.broadcast %cst_18 : f32 to vector<16x16xf32>
    %24 = arith.select %21, %22, %23 : vector<16x16xi1>, vector<16x16xf32>
    %cst_19 = arith.constant dense<0.000000e+00> : vector<16x128xf32>
    %25 = tpu.matmul %24, %18, %cst_19 {dimension_numbers = #tpu.dot_dimension_numbers<[1], [1], [0], [0], [0, 0, 1, 0], [], []>} : vector<16x16xf32>, vector<128x16xf32>, vector<16x128xf32> -> vector<16x128xf32>
    %cst_20 = arith.constant 2.000000e+01 : f32
    %26 = vector.broadcast %cst_20 : f32 to vector<16x128xf32>
    %27 = arith.minimumf %17, %26 : vector<16x128xf32>
    %28 = math.exp %27 : vector<16x128xf32>
    %cst_21 = arith.constant 2.000000e+01 : f32
    %29 = vector.broadcast %cst_21 : f32 to vector<16x128xf32>
    %30 = arith.cmpf ogt, %17, %29 : vector<16x128xf32>
    %cst_22 = arith.constant 1.000000e+00 : f32
    %31 = vector.broadcast %cst_22 : f32 to vector<16x128xf32>
    %32 = arith.addf %31, %28 : vector<16x128xf32>
    %33 = math.log %32 : vector<16x128xf32>
    %34 = arith.select %30, %17, %33 : vector<16x128xi1>, vector<16x128xf32>
    %35 = math.log %34 : vector<16x128xf32>
    %36 = tpu.reciprocal %34 {approx = true} : vector<16x128xf32> -> vector<16x128xf32>
    %37 = arith.mulf %34, %36 : vector<16x128xf32>
    %cst_23 = arith.constant 2.000000e+00 : f32
    %38 = vector.broadcast %cst_23 : f32 to vector<16x128xf32>
    %39 = arith.subf %38, %37 : vector<16x128xf32>
    %40 = arith.mulf %36, %39 : vector<16x128xf32>
    %41 = arith.mulf %25, %35 : vector<16x128xf32>
    %42 = arith.addf %40, %41 : vector<16x128xf32>
    %cst_24 = arith.constant 1.000000e+00 : f32
    %43 = vector.broadcast %cst_24 : f32 to vector<16x128xf32>
    %44 = arith.addf %25, %43 : vector<16x128xf32>
    %45 = tpu.reciprocal %44 {approx = true} : vector<16x128xf32> -> vector<16x128xf32>
    %46 = arith.mulf %45, %45 : vector<16x128xf32>
    %cst_25 = arith.constant 5.000000e-01 : f32
    %47 = vector.broadcast %cst_25 : f32 to vector<16x128xf32>
    %48 = arith.subf %44, %47 : vector<16x128xf32>
    %49 = math.log %44 : vector<16x128xf32>
    %50 = arith.mulf %48, %49 : vector<16x128xf32>
    %cst_26 = arith.constant 0.918938517 : f32
    %51 = vector.broadcast %cst_26 : f32 to vector<16x128xf32>
    %52 = arith.addf %51, %50 : vector<16x128xf32>
    %53 = arith.subf %52, %44 : vector<16x128xf32>
    %cst_27 = arith.constant 0.00277777785 : f32
    %54 = vector.broadcast %cst_27 : f32 to vector<16x128xf32>
    %55 = arith.mulf %54, %46 : vector<16x128xf32>
    %cst_28 = arith.constant 0.0833333358 : f32
    %56 = vector.broadcast %cst_28 : f32 to vector<16x128xf32>
    %57 = arith.subf %56, %55 : vector<16x128xf32>
    %58 = arith.mulf %45, %57 : vector<16x128xf32>
    %59 = arith.addf %53, %58 : vector<16x128xf32>
    %cst_29 = arith.constant 1.000000e+00 : f32
    %60 = vector.broadcast %cst_29 : f32 to vector<16x128xf32>
    %61 = arith.cmpf olt, %25, %60 : vector<16x128xf32>
    %cst_30 = arith.constant 0.000000e+00 : f32
    %62 = vector.broadcast %cst_30 : f32 to vector<16x128xf32>
    %63 = arith.select %61, %62, %59 : vector<16x128xi1>, vector<16x128xf32>
    %64 = arith.addf %42, %63 : vector<16x128xf32>
    %cst_31 = arith.constant dense<0.000000e+00> : vector<128xf32>
    %65 = vector.multi_reduction <add>, %64, %cst_31 [0] : vector<16x128xf32> to vector<128xf32>
    %66 = vector.shape_cast %65 : vector<128xf32> to vector<1x128xf32>
    %cst_32 = arith.constant 6.250000e-02 : f32
    %67 = vector.broadcast %cst_32 : f32 to vector<1x128xf32>
    %68 = arith.mulf %66, %67 : vector<1x128xf32>
    %c0_33 = arith.constant 0 : index
    %c0_34 = arith.constant 0 : index
    %69 = vector.load %arg9[%c0_33, %c0_34] : memref<1x128xf32, #tpu.memory_space<vmem>>, vector<1x128xf32>
    tpu.vector_store %arg9[%c0_33, %c0_34], %68 {strides = array<i32>} : memref<1x128xf32, #tpu.memory_space<vmem>>, vector<1x128xf32>,
    return
  }
  func.func @transform_0(%arg0: i32) -> (i32, i32) {
    %c0_i32 = arith.constant 0 : i32
    %c0_i32_0 = arith.constant 0 : i32
    return %arg0, %c0_i32 : i32, i32
  }
  func.func @transform_1(%arg0: i32) -> (i32, i32) {
    %c0_i32 = arith.constant 0 : i32
    %c0_i32_0 = arith.constant 0 : i32
    return %arg0, %c0_i32 : i32, i32
  }
  func.func @transform_2(%arg0: i32) -> (i32, i32) {
    %c0_i32 = arith.constant 0 : i32
    %c0_i32_0 = arith.constant 0 : i32
    %c0_i32_1 = arith.constant 0 : i32
    return %c0_i32, %c0_i32_0 : i32, i32
  }
  func.func @transform_3(%arg0: i32) -> (i32, i32) {
    %c0_i32 = arith.constant 0 : i32
    %c0_i32_0 = arith.constant 0 : i32
    %c0_i32_1 = arith.constant 0 : i32
    return %c0_i32, %c0_i32_0 : i32, i32
  }
  func.func @transform_4(%arg0: i32) -> (i32, i32) {
    %c0_i32 = arith.constant 0 : i32
    %c0_i32_0 = arith.constant 0 : i32
    %c0_i32_1 = arith.constant 0 : i32
    return %c0_i32, %c0_i32_0 : i32, i32
  }
  func.func @transform_5(%arg0: i32) -> (i32, i32) {
    %c0_i32 = arith.constant 0 : i32
    %c0_i32_0 = arith.constant 0 : i32
    %c0_i32_1 = arith.constant 0 : i32
    return %c0_i32, %c0_i32_0 : i32, i32
  }
  func.func @transform_6(%arg0: i32) -> (i32, i32) {
    %c0_i32 = arith.constant 0 : i32
    %c0_i32_0 = arith.constant 0 : i32
    %c0_i32_1 = arith.constant 0 : i32
    return %c0_i32, %c0_i32_0 : i32, i32
  }
  func.func @transform_7(%arg0: i32) -> (i32, i32) {
    %c0_i32 = arith.constant 0 : i32
    %c0_i32_0 = arith.constant 0 : i32
    %c0_i32_1 = arith.constant 0 : i32
    return %c0_i32, %c0_i32_0 : i32, i32
  }
  func.func @transform_8(%arg0: i32) -> (i32, i32) {
    %c0_i32 = arith.constant 0 : i32
    %c0_i32_0 = arith.constant 0 : i32
    return %c0_i32, %arg0 : i32, i32
  }
}

</mosaic_0001>

<llo_original>
// kernel: tpu_custom_call.1
$region0: #{tpu_custom_call.1}
  #allocation0 [shape = 'u32[]', space=smem, size = 0x4, offset = 0x4, fixed_abs, tag = 'smem constant byte address 0x4 - core index']
  #allocation1 [shape = 'u32[144,128]{1,0:T(1,128)}', space=vmem, size = 0x12000, scoped, tag = 'internal scratch']
  %s0 = inlined_call_operand.vmem [shape: f32[128,8], index: 0, kind: input, shape index: {}]
  %s1 = inlined_call_operand.vmem [shape: f32[128,16], index: 1, kind: input, shape index: {}]
  %s2 = inlined_call_operand.vmem [shape: f32[32,8], index: 2, kind: input, shape index: {}]
  %s3 = inlined_call_operand.vmem [shape: f32[32,1], index: 3, kind: input, shape index: {}]
  %s4 = inlined_call_operand.vmem [shape: f32[64,32], index: 4, kind: input, shape index: {}]
  %s5 = inlined_call_operand.vmem [shape: f32[64,1], index: 5, kind: input, shape index: {}]
  %s6 = inlined_call_operand.vmem [shape: f32[16,64], index: 6, kind: input, shape index: {}]
  %s7 = inlined_call_operand.vmem [shape: f32[16,1], index: 7, kind: input, shape index: {}]
  %s8 = inlined_call_operand.hbm [shape: f32[1,128], index: 8, kind: output, shape index: {}]
  %s9 = sld [smem:[#allocation0]]
  $region42: #{tpu_custom_call.1} parent=0
    _
  %s11 = ssub.s32 1, %s9
  %s12 = scalar_select 0, %s11, %s9
  $region1: #{tpu_custom_call.1} parent=0
    #allocation2 [shape = 'u8[512]{0}', space=vmem, size = 0x400, scoped, tag = 'output window, operand 0, single buffered']
    #allocation3 [shape = 's32[1]{0}', space=sflag, size = 0x4, scoped, tag = 'scoped memory for tpu_custom_call.1']
    %13 = vsyncpa [#allocation3], 0
    // Predicated region
    $region2: #{tpu_custom_call.1} parent=1 // pred_check
      _
    $region3: #{tpu_custom_call.1} parent=1 // pred_check_branch
      %15 = sbr.rel (0) target = $region5
    $region4: #{tpu_custom_call.1} parent=1 // pred_region
      _
    $region5: #{tpu_custom_call.1} parent=1 // pred_fallthru
      _
    // Predicated region
    $region6: #{tpu_custom_call.1} parent=1 // pred_check
      _
    $region7: #{tpu_custom_call.1} parent=1 // pred_check_branch
      %17 = sbr.rel (0) target = $region9
    $region8: #{tpu_custom_call.1} parent=1 // pred_region
      _
    $region9: #{tpu_custom_call.1} parent=1 // pred_fallthru
      _
    // Predicated region
    $region10: #{tpu_custom_call.1} parent=1 // pred_check
      _
    $region11: #{tpu_custom_call.1} parent=1 // pred_check_branch
      %19 = sbr.rel (0) target = $region13
    $region12: #{tpu_custom_call.1} parent=1 // pred_region
      _
    $region13: #{tpu_custom_call.1} parent=1 // pred_fallthru
      _
    // Predicated region
    $region14: #{tpu_custom_call.1} parent=1 // pred_check
      _
    $region15: #{tpu_custom_call.1} parent=1 // pred_check_branch
      %21 = sbr.rel (0) target = $region17
    $region16: #{tpu_custom_call.1} parent=1 // pred_region
      _
    $region17: #{tpu_custom_call.1} parent=1 // pred_fallthru
      _
    // Predicated region
    $region18: #{tpu_custom_call.1} parent=1 // pred_check
      _
    $region19: #{tpu_custom_call.1} parent=1 // pred_check_branch
      %23 = sbr.rel (0) target = $region21
    $region20: #{tpu_custom_call.1} parent=1 // pred_region
      _
    $region21: #{tpu_custom_call.1} parent=1 // pred_fallthru
      _
    // Predicated region
    $region22: #{tpu_custom_call.1} parent=1 // pred_check
      _
    $region23: #{tpu_custom_call.1} parent=1 // pred_check_branch
      %25 = sbr.rel (0) target = $region25
    $region24: #{tpu_custom_call.1} parent=1 // pred_region
      _
    $region25: #{tpu_custom_call.1} parent=1 // pred_fallthru
      _
    // Predicated region
    $region26: #{tpu_custom_call.1} parent=1 // pred_check
      _
    $region27: #{tpu_custom_call.1} parent=1 // pred_check_branch
      %27 = sbr.rel (0) target = $region29
    $region28: #{tpu_custom_call.1} parent=1 // pred_region
      _
    $region29: #{tpu_custom_call.1} parent=1 // pred_fallthru
      _
    // Predicated region
    $region30: #{tpu_custom_call.1} parent=1 // pred_check
      _
    $region31: #{tpu_custom_call.1} parent=1 // pred_check_branch
      %29 = sbr.rel (0) target = $region33
    $region32: #{tpu_custom_call.1} parent=1 // pred_region
      _
    $region33: #{tpu_custom_call.1} parent=1 // pred_fallthru
      _
    %v30 = vld [vmem:[%s0] sm:$0xff]
    %v31 = vld [vmem:[%s0 + $0x8] sm:$0xff]
    %v32 = vld [vmem:[%s0 + $0x10] sm:$0xff]
    %v33 = vld [vmem:[%s0 + $0x18] sm:$0xff]
    %v34 = vld [vmem:[%s0 + $0x20] sm:$0xff]
    %v35 = vld [vmem:[%s0 + $0x28] sm:$0xff]
    %v36 = vld [vmem:[%s0 + $0x30] sm:$0xff]
    %v37 = vld [vmem:[%s0 + $0x38] sm:$0xff]
    %v38 = vld [vmem:[%s0 + $0x40] sm:$0xff]
    %v39 = vld [vmem:[%s0 + $0x48] sm:$0xff]
    %v40 = vld [vmem:[%s0 + $0x50] sm:$0xff]
    %v41 = vld [vmem:[%s0 + $0x58] sm:$0xff]
    %v42 = vld [vmem:[%s0 + $0x60] sm:$0xff]
    %v43 = vld [vmem:[%s0 + $0x68] sm:$0xff]
    %v44 = vld [vmem:[%s0 + $0x70] sm:$0xff]
    %v45 = vld [vmem:[%s0 + $0x78] sm:$0xff]
    %v46 = vld [vmem:[%s2] sm:$0xff]
    %v47 = vld [vmem:[%s2 + $0x8] sm:$0xff]
    %v48 = vld [vmem:[%s2 + $0x10] sm:$0xff]
    %v49 = vld [vmem:[%s2 + $0x18] sm:$0xff]
    %v50 = vld [vmem:[%s3] sm:$0xff]
    %v51 = vld [vmem:[%s3 + $0x8] sm:$0xff]
    %v52 = vld [vmem:[%s3 + $0x10] sm:$0xff]
    %v53 = vld [vmem:[%s3 + $0x18] sm:$0xff]
    %55 = vset.pattern.permute.xlu0 0
    %56 = vperm.xlu0 %55, %v50
    %v57 = vpop.permute.xlu0 %56
    %60 = vset.pattern.permute.xlu0 0
    %61 = vperm.xlu0 %60, %v51
    %v62 = vpop.permute.xlu0 %61
    %65 = vset.pattern.permute.xlu0 0
    %66 = vperm.xlu0 %65, %v52
    %v67 = vpop.permute.xlu0 %66
    %70 = vset.pattern.permute.xlu0 0
    %71 = vperm.xlu0 %70, %v53
    %v72 = vpop.permute.xlu0 %71
    %vm74 = vcmask 64512
    %v76 = vsel %vm74, %v46, 0
    %v79 = vsel %vm74, %v47, 0
    %v82 = vsel %vm74, %v48, 0
    %v85 = vsel %vm74, %v49, 0
    %v88 = vsel %vm74, %v30, 0
    %v91 = vsel %vm74, %v31, 0
    %v94 = vsel %vm74, %v32, 0
    %v97 = vsel %vm74, %v33, 0
    %v100 = vsel %vm74, %v34, 0
    %v103 = vsel %vm74, %v35, 0
    %v106 = vsel %vm74, %v36, 0
    %v109 = vsel %vm74, %v37, 0
    %v112 = vsel %vm74, %v38, 0
    %v115 = vsel %vm74, %v39, 0
    %v118 = vsel %vm74, %v40, 0
    %v121 = vsel %vm74, %v41, 0
    %v124 = vsel %vm74, %v42, 0
    %v127 = vsel %vm74, %v43, 0
    %v130 = vsel %vm74, %v44, 0
    %v133 = vsel %vm74, %v45, 0
    %135 = vmatprep.subr.mxu0 0.0
    %136 = vmatpush1.xpose.msra.mxu0 %v133
    %137 = vmatprep.subr.mxu0 0.0
    %138 = vmatpush1.xpose.msra.mxu0 %v130
    %139 = vmatprep.subr.mxu0 0.0
    %140 = vmatpush1.xpose.msra.mxu0 %v127
    %141 = vmatprep.subr.mxu0 0.0
    %142 = vmatpush1.xpose.msra.mxu0 %v124
    %143 = vmatprep.subr.mxu0 0.0
    %144 = vmatpush1.xpose.msra.mxu0 %v121
    %145 = vmatprep.subr.mxu0 0.0
    %146 = vmatpush1.xpose.msra.mxu0 %v118
    %147 = vmatprep.subr.mxu0 0.0
    %148 = vmatpush1.xpose.msra.mxu0 %v115
    %149 = vmatprep.subr.mxu0 0.0
    %150 = vmatpush1.xpose.msra.mxu0 %v112
    %151 = vmatprep.subr.mxu0 0.0
    %152 = vmatpush1.xpose.msra.mxu0 %v109
    %153 = vmatprep.subr.mxu0 0.0
    %154 = vmatpush1.xpose.msra.mxu0 %v106
    %155 = vmatprep.subr.mxu0 0.0
    %156 = vmatpush1.xpose.msra.mxu0 %v103
    %157 = vmatprep.subr.mxu0 0.0
    %158 = vmatpush1.xpose.msra.mxu0 %v100
    %159 = vmatprep.subr.mxu0 0.0
    %160 = vmatpush1.xpose.msra.mxu0 %v97
    %161 = vmatprep.subr.mxu0 0.0
    %162 = vmatpush1.xpose.msra.mxu0 %v94
    %163 = vmatprep.subr.mxu0 0.0
    %164 = vmatpush1.xpose.msra.mxu0 %v91
    %165 = vmatprep.subr.mxu0 0.0
    %166 = vmatpush1.xpose.msra.mxu0 %v88
    %167 = vmatprep.subr.mxu0 0.0
    %168 = vmatpush2.xpose.msra.mxu0 0.0
    %169 = vmatprep.subr.mxu0 0.0
    %170 = vmatpush2.xpose.msra.mxu0 0.0
    %171 = vmatprep.subr.mxu0 0.0
    %172 = vmatpush2.xpose.msra.mxu0 0.0
    %173 = vmatprep.subr.mxu0 0.0
    %174 = vmatpush2.xpose.msra.mxu0 0.0
    %175 = vmatprep.subr.mxu0 0.0
    %176 = vmatpush2.xpose.msra.mxu0 0.0
    %177 = vmatprep.subr.mxu0 0.0
    %178 = vmatpush2.xpose.msra.mxu0 0.0
    %179 = vmatprep.subr.mxu0 0.0
    %180 = vmatpush2.xpose.msra.mxu0 0.0
    %181 = vmatprep.subr.mxu0 0.0
    %182 = vmatpush2.xpose.msra.mxu0 0.0
    %183 = vmatprep.subr.mxu0 0.0
    %184 = vmatpush2.xpose.msra.mxu0 0.0
    %185 = vmatprep.subr.mxu0 0.0
    %186 = vmatpush2.xpose.msra.mxu0 0.0
    %187 = vmatprep.subr.mxu0 0.0
    %188 = vmatpush2.xpose.msra.mxu0 0.0
    %189 = vmatprep.subr.mxu0 0.0
    %190 = vmatpush2.xpose.msra.mxu0 0.0
    %191 = vmatprep.subr.mxu0 0.0
    %192 = vmatpush2.xpose.msra.mxu0 0.0
    %193 = vmatprep.subr.mxu0 0.0
    %194 = vmatpush2.xpose.msra.mxu0 0.0
    %195 = vmatprep.subr.mxu0 0.0
    %196 = vmatpush2.xpose.msra.mxu0 0.0
    %197 = vmatprep.subr.mxu0 0.0
    %198 = vmatpush2.xpose.msra.mxu0 0.0
    %199 = vmatprep.mubr.f32.mxu0 0.0
    %200 = vmatmul.mubr.f32.gmra.mxu0 %v76
    %v201 = vpop.f32.mrf.mxu0
    %v202 = vadd.f32 %v57, %v201
    %v203 = vpop.f32.mrf.mxu0
    %204 = vmatprep.mubr.f32.mxu0 0.0
    %205 = vmatmul.mubr.f32.gmra.mxu0 %v79
    %v206 = vpop.f32.mrf.mxu0
    %v207 = vadd.f32 %v62, %v206
    %v208 = vpop.f32.mrf.mxu0
    %209 = vmatprep.mubr.f32.mxu0 0.0
    %210 = vmatmul.mubr.f32.gmra.mxu0 %v82
    %v211 = vpop.f32.mrf.mxu0
    %v212 = vadd.f32 %v67, %v211
    %v213 = vpop.f32.mrf.mxu0
    %214 = vmatprep.mubr.f32.mxu0 0.0
    %215 = vmatmul.mubr.f32.gmra.mxu0 %v85
    %v216 = vpop.f32.mrf.mxu0
    %v217 = vadd.f32 %v72, %v216
    %v218 = vpop.f32.mrf.mxu0
    %219 = vdwg.mxu0
    %v220 = vtanh.pop %v202
    %v221 = vtanh.pop %v207
    %v222 = vtanh.pop %v212
    %v223 = vtanh.pop %v217
    %v224 = vld [vmem:[%s4] sm:$0xff]
    %v225 = vld [vmem:[%s4 + $0x8] sm:$0xff]
    %v226 = vld [vmem:[%s4 + $0x10] sm:$0xff]
    %v227 = vld [vmem:[%s4 + $0x18] sm:$0xff]
    %v228 = vld [vmem:[%s4 + $0x20] sm:$0xff]
    %v229 = vld [vmem:[%s4 + $0x28] sm:$0xff]
    %v230 = vld [vmem:[%s4 + $0x30] sm:$0xff]
    %v231 = vld [vmem:[%s4 + $0x38] sm:$0xff]
    %v232 = vld [vmem:[%s5] sm:$0xff]
    %v233 = vld [vmem:[%s5 + $0x8] sm:$0xff]
    %v234 = vld [vmem:[%s5 + $0x10] sm:$0xff]
    %v235 = vld [vmem:[%s5 + $0x18] sm:$0xff]
    %v236 = vld [vmem:[%s5 + $0x20] sm:$0xff]
    %v237 = vld [vmem:[%s5 + $0x28] sm:$0xff]
    %v238 = vld [vmem:[%s5 + $0x30] sm:$0xff]
    %v239 = vld [vmem:[%s5 + $0x38] sm:$0xff]
    %241 = vset.pattern.permute.xlu0 0
    %242 = vperm.xlu0 %241, %v232
    %v243 = vpop.permute.xlu0 %242
    %246 = vset.pattern.permute.xlu0 0
    %247 = vperm.xlu0 %246, %v233
    %v248 = vpop.permute.xlu0 %247
    %251 = vset.pattern.permute.xlu0 0
    %252 = vperm.xlu0 %251, %v234
    %v253 = vpop.permute.xlu0 %252
    %256 = vset.pattern.permute.xlu0 0
    %257 = vperm.xlu0 %256, %v235
    %v258 = vpop.permute.xlu0 %257
    %261 = vset.pattern.permute.xlu0 0
    %262 = vperm.xlu0 %261, %v236
    %v263 = vpop.permute.xlu0 %262
    %266 = vset.pattern.permute.xlu0 0
    %267 = vperm.xlu0 %266, %v237
    %v268 = vpop.permute.xlu0 %267
    %271 = vset.pattern.permute.xlu0 0
    %272 = vperm.xlu0 %271, %v238
    %v273 = vpop.permute.xlu0 %272
    %276 = vset.pattern.permute.xlu0 0
    %277 = vperm.xlu0 %276, %v239
    %v278 = vpop.permute.xlu0 %277
    %vm280 = vcmask 261120
    %v282 = vsel %vm280, %v224, 0
    %v285 = vsel %vm280, %v225, 0
    %v288 = vsel %vm280, %v226, 0
    %v291 = vsel %vm280, %v227, 0
    %v294 = vsel %vm280, %v228, 0
    %v297 = vsel %vm280, %v229, 0
    %v300 = vsel %vm280, %v230, 0
    %v303 = vsel %vm280, %v231, 0
    %305 = vmatprep.subr.mxu0 0.0
    %306 = vmatpush1.msra.mxu0 0.0
    %307 = vmatprep.subr.mxu0 0.0
    %308 = vmatpush1.msra.mxu0 0.0
    %309 = vmatprep.subr.mxu0 0.0
    %310 = vmatpush1.msra.mxu0 0.0
    %311 = vmatprep.subr.mxu0 0.0
    %312 = vmatpush1.msra.mxu0 0.0
    %313 = vmatprep.subr.mxu0 0.0
    %314 = vmatpush1.msra.mxu0 0.0
    %315 = vmatprep.subr.mxu0 0.0
    %316 = vmatpush1.msra.mxu0 0.0
    %317 = vmatprep.subr.mxu0 0.0
    %318 = vmatpush1.msra.mxu0 0.0
    %319 = vmatprep.subr.mxu0 0.0
    %320 = vmatpush1.msra.mxu0 0.0
    %321 = vmatprep.subr.mxu0 0.0
    %322 = vmatpush1.msra.mxu0 0.0
    %323 = vmatprep.subr.mxu0 0.0
    %324 = vmatpush1.msra.mxu0 0.0
    %325 = vmatprep.subr.mxu0 0.0
    %326 = vmatpush1.msra.mxu0 0.0
    %327 = vmatprep.subr.mxu0 0.0
    %328 = vmatpush1.msra.mxu0 0.0
    %329 = vmatprep.subr.mxu0 0.0
    %330 = vmatpush1.msra.mxu0 %v223
    %331 = vmatprep.subr.mxu0 0.0
    %332 = vmatpush1.msra.mxu0 %v222
    %333 = vmatprep.subr.mxu0 0.0
    %334 = vmatpush1.msra.mxu0 %v221
    %335 = vmatprep.subr.mxu0 0.0
    %336 = vmatpush1.msra.mxu0 %v220
    %337 = vmatprep.subr.mxu0 0.0
    %338 = vmatpush2.msra.mxu0 0.0
    %339 = vmatprep.subr.mxu0 0.0
    %340 = vmatpush2.msra.mxu0 0.0
    %341 = vmatprep.subr.mxu0 0.0
    %342 = vmatpush2.msra.mxu0 0.0
    %343 = vmatprep.subr.mxu0 0.0
    %344 = vmatpush2.msra.mxu0 0.0
    %345 = vmatprep.subr.mxu0 0.0
    %346 = vmatpush2.msra.mxu0 0.0
    %347 = vmatprep.subr.mxu0 0.0
    %348 = vmatpush2.msra.mxu0 0.0
    %349 = vmatprep.subr.mxu0 0.0
    %350 = vmatpush2.msra.mxu0 0.0
    %351 = vmatprep.subr.mxu0 0.0
    %352 = vmatpush2.msra.mxu0 0.0
    %353 = vmatprep.subr.mxu0 0.0
    %354 = vmatpush2.msra.mxu0 0.0
    %355 = vmatprep.subr.mxu0 0.0
    %356 = vmatpush2.msra.mxu0 0.0
    %357 = vmatprep.subr.mxu0 0.0
    %358 = vmatpush2.msra.mxu0 0.0
    %359 = vmatprep.subr.mxu0 0.0
    %360 = vmatpush2.msra.mxu0 0.0
    %361 = vmatprep.subr.mxu0 0.0
    %362 = vmatpush2.msra.mxu0 0.0
    %363 = vmatprep.subr.mxu0 0.0
    %364 = vmatpush2.msra.mxu0 0.0
    %365 = vmatprep.subr.mxu0 0.0
    %366 = vmatpush2.msra.mxu0 0.0
    %367 = vmatprep.subr.mxu0 0.0
    %368 = vmatpush2.msra.mxu0 0.0
    %369 = vmatprep.mubr.f32.mxu0 0.0
    %370 = vmatmul.mubr.f32.gmra.mxu0 %v282
    %v371 = vpop.f32.mrf.mxu0
    %v372 = vadd.f32 %v243, %v371
    %v373 = vpop.f32.mrf.mxu0
    %374 = vmatprep.mubr.f32.mxu0 0.0
    %375 = vmatmul.mubr.f32.gmra.mxu0 %v285
    %v376 = vpop.f32.mrf.mxu0
    %v377 = vadd.f32 %v248, %v376
    %v378 = vpop.f32.mrf.mxu0
    %379 = vmatprep.mubr.f32.mxu0 0.0
    %380 = vmatmul.mubr.f32.gmra.mxu0 %v288
    %v381 = vpop.f32.mrf.mxu0
    %v382 = vadd.f32 %v253, %v381
    %v383 = vpop.f32.mrf.mxu0
    %384 = vmatprep.mubr.f32.mxu0 0.0
    %385 = vmatmul.mubr.f32.gmra.mxu0 %v291
    %v386 = vpop.f32.mrf.mxu0
    %v387 = vadd.f32 %v258, %v386
    %v388 = vpop.f32.mrf.mxu0
    %389 = vmatprep.mubr.f32.mxu0 0.0
    %390 = vmatmul.mubr.f32.gmra.mxu0 %v294
    %v391 = vpop.f32.mrf.mxu0
    %v392 = vadd.f32 %v263, %v391
    %v393 = vpop.f32.mrf.mxu0
    %394 = vmatprep.mubr.f32.mxu0 0.0
    %395 = vmatmul.mubr.f32.gmra.mxu0 %v297
    %v396 = vpop.f32.mrf.mxu0
    %v397 = vadd.f32 %v268, %v396
    %v398 = vpop.f32.mrf.mxu0
    %399 = vmatprep.mubr.f32.mxu0 0.0
    %400 = vmatmul.mubr.f32.gmra.mxu0 %v300
    %v401 = vpop.f32.mrf.mxu0
    %v402 = vadd.f32 %v273, %v401
    %v403 = vpop.f32.mrf.mxu0
    %404 = vmatprep.mubr.f32.mxu0 0.0
    %405 = vmatmul.mubr.f32.gmra.mxu0 %v303
    %v406 = vpop.f32.mrf.mxu0
    %v407 = vadd.f32 %v278, %v406
    %v408 = vpop.f32.mrf.mxu0
    %409 = vdwg.mxu0
    %v410 = vtanh.pop %v372
    %v411 = vtanh.pop %v377
    %v412 = vtanh.pop %v382
    %v413 = vtanh.pop %v387
    %v414 = vtanh.pop %v392
    %v415 = vtanh.pop %v397
    %v416 = vtanh.pop %v402
    %v417 = vtanh.pop %v407
    %v418 = vld [vmem:[%s6] sm:$0xff]
    %v419 = vld [vmem:[%s6 + $0x8] sm:$0xff]
    %v420 = vld [vmem:[%s7] sm:$0xff]
    %v421 = vld [vmem:[%s7 + $0x8] sm:$0xff]
    %423 = vset.pattern.permute.xlu0 0
    %424 = vperm.xlu0 %423, %v420
    %v425 = vpop.permute.xlu0 %424
    %428 = vset.pattern.permute.xlu0 0
    %429 = vperm.xlu0 %428, %v421
    %v430 = vpop.permute.xlu0 %429
    %vm432 = vcmask 523264
    %v434 = vsel %vm432, %v418, 0
    %v437 = vsel %vm432, %v419, 0
    %439 = vmatprep.subr.mxu0 0.0
    %440 = vmatpush1.msra.mxu0 0.0
    %441 = vmatprep.subr.mxu0 0.0
    %442 = vmatpush1.msra.mxu0 0.0
    %443 = vmatprep.subr.mxu0 0.0
    %444 = vmatpush1.msra.mxu0 0.0
    %445 = vmatprep.subr.mxu0 0.0
    %446 = vmatpush1.msra.mxu0 0.0
    %447 = vmatprep.subr.mxu0 0.0
    %448 = vmatpush1.msra.mxu0 0.0
    %449 = vmatprep.subr.mxu0 0.0
    %450 = vmatpush1.msra.mxu0 0.0
    %451 = vmatprep.subr.mxu0 0.0
    %452 = vmatpush1.msra.mxu0 0.0
    %453 = vmatprep.subr.mxu0 0.0
    %454 = vmatpush1.msra.mxu0 0.0
    %455 = vmatprep.subr.mxu0 0.0
    %456 = vmatpush1.msra.mxu0 %v417
    %457 = vmatprep.subr.mxu0 0.0
    %458 = vmatpush1.msra.mxu0 %v416
    %459 = vmatprep.subr.mxu0 0.0
    %460 = vmatpush1.msra.mxu0 %v415
    %461 = vmatprep.subr.mxu0 0.0
    %462 = vmatpush1.msra.mxu0 %v414
    %463 = vmatprep.subr.mxu0 0.0
    %464 = vmatpush1.msra.mxu0 %v413
    %465 = vmatprep.subr.mxu0 0.0
    %466 = vmatpush1.msra.mxu0 %v412
    %467 = vmatprep.subr.mxu0 0.0
    %468 = vmatpush1.msra.mxu0 %v411
    %469 = vmatprep.subr.mxu0 0.0
    %470 = vmatpush1.msra.mxu0 %v410
    %471 = vmatprep.subr.mxu0 0.0
    %472 = vmatpush2.msra.mxu0 0.0
    %473 = vmatprep.subr.mxu0 0.0
    %474 = vmatpush2.msra.mxu0 0.0
    %475 = vmatprep.subr.mxu0 0.0
    %476 = vmatpush2.msra.mxu0 0.0
    %477 = vmatprep.subr.mxu0 0.0
    %478 = vmatpush2.msra.mxu0 0.0
    %479 = vmatprep.subr.mxu0 0.0
    %480 = vmatpush2.msra.mxu0 0.0
    %481 = vmatprep.subr.mxu0 0.0
    %482 = vmatpush2.msra.mxu0 0.0
    %483 = vmatprep.subr.mxu0 0.0
    %484 = vmatpush2.msra.mxu0 0.0
    %485 = vmatprep.subr.mxu0 0.0
    %486 = vmatpush2.msra.mxu0 0.0
    %487 = vmatprep.subr.mxu0 0.0
    %488 = vmatpush2.msra.mxu0 0.0
    %489 = vmatprep.subr.mxu0 0.0
    %490 = vmatpush2.msra.mxu0 0.0
    %491 = vmatprep.subr.mxu0 0.0
    %492 = vmatpush2.msra.mxu0 0.0
    %493 = vmatprep.subr.mxu0 0.0
    %494 = vmatpush2.msra.mxu0 0.0
    %495 = vmatprep.subr.mxu0 0.0
    %496 = vmatpush2.msra.mxu0 0.0
    %497 = vmatprep.subr.mxu0 0.0
    %498 = vmatpush2.msra.mxu0 0.0
    %499 = vmatprep.subr.mxu0 0.0
    %500 = vmatpush2.msra.mxu0 0.0
    %501 = vmatprep.subr.mxu0 0.0
    %502 = vmatpush2.msra.mxu0 0.0
    %503 = vmatprep.mubr.f32.mxu0 0.0
    %504 = vmatmul.mubr.f32.gmra.mxu0 %v434
    %v505 = vpop.f32.mrf.mxu0
    %v506 = vadd.f32 %v425, %v505
    %v507 = vpop.f32.mrf.mxu0
    %508 = vmatprep.mubr.f32.mxu0 0.0
    %509 = vmatmul.mubr.f32.gmra.mxu0 %v437
    %v510 = vpop.f32.mrf.mxu0
    %v511 = vadd.f32 %v430, %v510
    %v512 = vpop.f32.mrf.mxu0
    %513 = vdwg.mxu0
    %v514 = vld [vmem:[%s1] sm:$0xff]
    %v515 = vld [vmem:[%s1 + $0x8] sm:$0xff]
    %v516 = vld [vmem:[%s1 + $0x10] sm:$0xff]
    %v517 = vld [vmem:[%s1 + $0x18] sm:$0xff]
    %v518 = vld [vmem:[%s1 + $0x20] sm:$0xff]
    %v519 = vld [vmem:[%s1 + $0x28] sm:$0xff]
    %v520 = vld [vmem:[%s1 + $0x30] sm:$0xff]
    %v521 = vld [vmem:[%s1 + $0x38] sm:$0xff]
    %v522 = vld [vmem:[%s1 + $0x40] sm:$0xff]
    %v523 = vld [vmem:[%s1 + $0x48] sm:$0xff]
    %v524 = vld [vmem:[%s1 + $0x50] sm:$0xff]
    %v525 = vld [vmem:[%s1 + $0x58] sm:$0xff]
    %v526 = vld [vmem:[%s1 + $0x60] sm:$0xff]
    %v527 = vld [vmem:[%s1 + $0x68] sm:$0xff]
    %v528 = vld [vmem:[%s1 + $0x70] sm:$0xff]
    %v529 = vld [vmem:[%s1 + $0x78] sm:$0xff]
    %v530 = vlaneseq
    %v531 = vshrl.u32 %v530, 7
    %v532 = vadd.s32 %v531, 8
    %v533 = vlaneseq
    %v534 = vand.u32 %v533, 127
    %vm535 = vcmp.eq.s32.totalorder %v531, %v534
    %vm536 = vcmp.eq.s32.totalorder %v532, %v534
    %v537 = vsel %vm535, 1.0, 0.0
    %v538 = vsel %vm536, 1.0, 0.0
    %vm539 = vcmask 130048
    %v541 = vsel %vm539, %v537, 0
    %v544 = vsel %vm539, %v538, 0
    %v547 = vsel %vm539, %v514, 0
    %v550 = vsel %vm539, %v515, 0
    %v553 = vsel %vm539, %v516, 0
    %v556 = vsel %vm539, %v517, 0
    %v559 = vsel %vm539, %v518, 0
    %v562 = vsel %vm539, %v519, 0
    %v565 = vsel %vm539, %v520, 0
    %v568 = vsel %vm539, %v521, 0
    %v571 = vsel %vm539, %v522, 0
    %v574 = vsel %vm539, %v523, 0
    %v577 = vsel %vm539, %v524, 0
    %v580 = vsel %vm539, %v525, 0
    %v583 = vsel %vm539, %v526, 0
    %v586 = vsel %vm539, %v527, 0
    %v589 = vsel %vm539, %v528, 0
    %v592 = vsel %vm539, %v529, 0
    %594 = vmatprep.subr.mxu0 0.0
    %595 = vmatpush1.xpose.msra.mxu0 %v592
    %596 = vmatprep.subr.mxu0 0.0
    %597 = vmatpush1.xpose.msra.mxu0 %v589
    %598 = vmatprep.subr.mxu0 0.0
    %599 = vmatpush1.xpose.msra.mxu0 %v586
    %600 = vmatprep.subr.mxu0 0.0
    %601 = vmatpush1.xpose.msra.mxu0 %v583
    %602 = vmatprep.subr.mxu0 0.0
    %603 = vmatpush1.xpose.msra.mxu0 %v580
    %604 = vmatprep.subr.mxu0 0.0
    %605 = vmatpush1.xpose.msra.mxu0 %v577
    %606 = vmatprep.subr.mxu0 0.0
    %607 = vmatpush1.xpose.msra.mxu0 %v574
    %608 = vmatprep.subr.mxu0 0.0
    %609 = vmatpush1.xpose.msra.mxu0 %v571
    %610 = vmatprep.subr.mxu0 0.0
    %611 = vmatpush1.xpose.msra.mxu0 %v568
    %612 = vmatprep.subr.mxu0 0.0
    %613 = vmatpush1.xpose.msra.mxu0 %v565
    %614 = vmatprep.subr.mxu0 0.0
    %615 = vmatpush1.xpose.msra.mxu0 %v562
    %616 = vmatprep.subr.mxu0 0.0
    %617 = vmatpush1.xpose.msra.mxu0 %v559
    %618 = vmatprep.subr.mxu0 0.0
    %619 = vmatpush1.xpose.msra.mxu0 %v556
    %620 = vmatprep.subr.mxu0 0.0
    %621 = vmatpush1.xpose.msra.mxu0 %v553
    %622 = vmatprep.subr.mxu0 0.0
    %623 = vmatpush1.xpose.msra.mxu0 %v550
    %624 = vmatprep.subr.mxu0 0.0
    %625 = vmatpush1.xpose.msra.mxu0 %v547
    %626 = vmatprep.subr.mxu0 0.0
    %627 = vmatpush2.xpose.msra.mxu0 0.0
    %628 = vmatprep.subr.mxu0 0.0
    %629 = vmatpush2.xpose.msra.mxu0 0.0
    %630 = vmatprep.subr.mxu0 0.0
    %631 = vmatpush2.xpose.msra.mxu0 0.0
    %632 = vmatprep.subr.mxu0 0.0
    %633 = vmatpush2.xpose.msra.mxu0 0.0
    %634 = vmatprep.subr.mxu0 0.0
    %635 = vmatpush2.xpose.msra.mxu0 0.0
    %636 = vmatprep.subr.mxu0 0.0
    %637 = vmatpush2.xpose.msra.mxu0 0.0
    %638 = vmatprep.subr.mxu0 0.0
    %639 = vmatpush2.xpose.msra.mxu0 0.0
    %640 = vmatprep.subr.mxu0 0.0
    %641 = vmatpush2.xpose.msra.mxu0 0.0
    %642 = vmatprep.subr.mxu0 0.0
    %643 = vmatpush2.xpose.msra.mxu0 0.0
    %644 = vmatprep.subr.mxu0 0.0
    %645 = vmatpush2.xpose.msra.mxu0 0.0
    %646 = vmatprep.subr.mxu0 0.0
    %647 = vmatpush2.xpose.msra.mxu0 0.0
    %648 = vmatprep.subr.mxu0 0.0
    %649 = vmatpush2.xpose.msra.mxu0 0.0
    %650 = vmatprep.subr.mxu0 0.0
    %651 = vmatpush2.xpose.msra.mxu0 0.0
    %652 = vmatprep.subr.mxu0 0.0
    %653 = vmatpush2.xpose.msra.mxu0 0.0
    %654 = vmatprep.subr.mxu0 0.0
    %655 = vmatpush2.xpose.msra.mxu0 0.0
    %656 = vmatprep.subr.mxu0 0.0
    %657 = vmatpush2.xpose.msra.mxu0 0.0
    %658 = vmatprep.mubr.f32.mxu0 0.0
    %659 = vmatmul.mubr.f32.gmra.mxu0 %v541
    %v660 = vpop.f32.mrf.mxu0
    %v661 = vadd.f32 0.0, %v660
    %v662 = vpop.f32.mrf.mxu0
    %663 = vmatprep.mubr.f32.mxu0 0.0
    %664 = vmatmul.mubr.f32.gmra.mxu0 %v544
    %v665 = vpop.f32.mrf.mxu0
    %v666 = vadd.f32 0.0, %v665
    %v667 = vpop.f32.mrf.mxu0
    %668 = vdwg.mxu0
    %v669 = vmin.f32 %v506, 20.0
    %v670 = vmin.f32 %v511, 20.0
    %v671 = vmul.f32 %v669, 1.442695
    %v672 = vpow.pop %v671
    %v673 = vmul.f32 %v670, 1.442695
    %v674 = vpow.pop %v673
    %vm675 = vcmp.gt.f32.partialorder %v506, 20.0
    %vm676 = vcmp.gt.f32.partialorder %v511, 20.0
    %v677 = vadd.f32 %v672, 1.0
    %v678 = vadd.f32 %v674, 1.0
    %v679 = vlog2.pop %v677
    %v680 = vmul.f32 %v679, 0.6931472
    %v681 = vlog2.pop %v678
    %v682 = vmul.f32 %v681, 0.6931472
    %v683 = vsel %vm675, %v506, %v680
    %v684 = vsel %vm676, %v511, %v682
    %v685 = vlog2.pop %v683
    %v686 = vmul.f32 %v685, 0.6931472
    %v687 = vlog2.pop %v684
    %v688 = vmul.f32 %v687, 0.6931472
    %v689 = vrcp.pop %v683
    %v690 = vrcp.pop %v684
    %v691 = vmul.f32 %v683, %v689
    %v692 = vmul.f32 %v684, %v690
    %v693 = vsub.f32 2.0, %v691
    %v694 = vsub.f32 2.0, %v692
    %v695 = vmul.f32 %v689, %v693
    %v696 = vmul.f32 %v690, %v694
    %v697 = vmul.f32 %v661, %v686
    %v698 = vmul.f32 %v666, %v688
    %v699 = vadd.f32 %v695, %v697
    %v700 = vadd.f32 %v696, %v698
    %v701 = vadd.f32 %v661, 1.0
    %v702 = vadd.f32 %v666, 1.0
    %v703 = vrcp.pop %v701
    %v704 = vrcp.pop %v702
    %v705 = vmul.f32 %v703, %v703
    %v706 = vmul.f32 %v704, %v704
    %v707 = vsub.f32 %v701, 0.5
    %v708 = vsub.f32 %v702, 0.5
    %v709 = vlog2.pop %v701
    %v710 = vmul.f32 %v709, 0.6931472
    %v711 = vlog2.pop %v702
    %v712 = vmul.f32 %v711, 0.6931472
    %v713 = vmul.f32 %v707, %v710
    %v714 = vmul.f32 %v708, %v712
    %v715 = vadd.f32 %v713, 0.9189385
    %v716 = vadd.f32 %v714, 0.9189385
    %v717 = vsub.f32 %v715, %v701
    %v718 = vsub.f32 %v716, %v702
    %v719 = vmul.f32 %v705, 0.0027777778
    %v720 = vmul.f32 %v706, 0.0027777778
    %v721 = vsub.f32 0.083333336, %v719
    %v722 = vsub.f32 0.083333336, %v720
    %v723 = vmul.f32 %v703, %v721
    %v724 = vmul.f32 %v704, %v722
    %v725 = vadd.f32 %v717, %v723
    %v726 = vadd.f32 %v718, %v724
    %vm727 = vcmp.lt.f32.partialorder %v661, 1.0
    %vm728 = vcmp.lt.f32.partialorder %v666, 1.0
    %v729 = vsel %vm727, 0.0, %v725
    %v730 = vsel %vm728, 0.0, %v726
    %v731 = vadd.f32 %v699, %v729
    %v732 = vadd.f32 %v700, %v730
    %v733 = vadd.f32 %v731, %v732
    %v734 = vrot.slane %v733, 4
    %v735 = vadd.f32 %v733, %v734
    %v736 = vrot.slane %v735, 2
    %v737 = vadd.f32 %v735, %v736
    %v738 = vrot.slane %v737, 1
    %v739 = vadd.f32 %v737, %v738
    %v740 = vmul.f32 %v739, 0.0625
    %741 = vst [vmem:[#allocation2] sm:$0x1] %v740
    // Predicated region
    $region34: #{tpu_custom_call.1} parent=1 // pred_check
      _
    $region35: #{tpu_custom_call.1} parent=1 // pred_check_branch
      %743 = sbr.rel (0) target = $region37
    $region36: #{tpu_custom_call.1} parent=1 // pred_region
      %s745 = ssub.s32 16, 16
      %746 = vsyncadd [#allocation3], %s745
      %s748 = sshll.u32 [#allocation2], 4
      %s749 = int_to_ptr.vmem [resolvable:$true] %s748
      %751 = dma.vmem_to_hbm [thread:$0]  %s749, 16, %s8, [#allocation3]
    $region37: #{tpu_custom_call.1} parent=1 // pred_fallthru
      _
    // Predicated region
    $region38: #{tpu_custom_call.1} parent=1 // pred_check
      _
    $region39: #{tpu_custom_call.1} parent=1 // pred_check_branch
      %753 = sbr.rel (0) target = $region41
    $region40: #{tpu_custom_call.1} parent=1 // pred_region
      %754 = dma.done [#allocation3], 16
    $region41: #{tpu_custom_call.1} parent=1 // pred_fallthru
      _
    %755 = vsyncpa [#allocation3], 1

</llo_original>
